<compile_context>
chip_gen: v7x
topology: tpu7x:2x2x1
jax: 0.10.0
libtpu: 0.0.40
codegen_flags: <defaults>
</compile_context>

<pallas_src>
import jax
import jax.numpy as jnp
from jax.experimental import pallas as pl
from jax.experimental.pallas import tpu as pltpu


def _pick_cols(n: int) -> int:
    """Largest multiple-of-128 divisor of n (capped at 4096), preferring one
    that leaves >= 8 rows so the copy can be split across cores and chunks.
    Falls back to 1 when n has no multiple-of-128 divisor; with HBM->HBM DMA
    this only changes slicing granularity (no masked vector stores exist)."""
    candidates = [c for c in range(128, 4097, 128) if n % c == 0]
    if not candidates:
        return 1
    roomy = [c for c in candidates if (n // c) >= 8]
    return max(roomy) if roomy else max(candidates)


def dummy_layer_forward(x: jax.Array, *, materialize_copy: bool = True) -> jax.Array:
    """Forward pass of DummyLayer (identity).

    DummyLayer.forward is a pure no-op, so with materialize_copy=False this
    returns `x` directly (zero HBM traffic -- the right choice when the caller
    donates the input or does not need a distinct output buffer).  With the
    default materialize_copy=True, a fresh output buffer is produced by a
    Pallas kernel that streams the bytes HBM->HBM with 2-4 outstanding DMAs.
    """
    if not materialize_copy or x.size == 0:
        return x

    n = x.size
    itemsize = jnp.dtype(x.dtype).itemsize

    cols = _pick_cols(n)
    rows = n // cols

    # Split across 2 grid steps when it divides evenly: on v7x the "parallel"
    # axis shards DMA issue across both TensorCores; on v5e/v6e the extra
    # sequential step is ~0.35 us of overhead (negligible vs. the copy).
    num_programs = 2 if (rows % 2 == 0 and rows >= 2) else 1
    rows_per_prog = rows // num_programs

    # 2-4 outstanding DMA chunks per program, all exactly the same size.
    n_chunks = min(4, rows_per_prog)
    while rows_per_prog % n_chunks != 0:
        n_chunks -= 1
    chunk_rows = rows_per_prog // n_chunks

    def _copy_kernel(x_hbm, o_hbm, sems):
        base = pl.program_id(0) * rows_per_prog
        # Issue all chunk copies, then wait: a few outstanding HBM->HBM DMAs.
        for c in range(n_chunks):
            start = base + c * chunk_rows
            pltpu.make_async_copy(
                x_hbm.at[pl.ds(start, chunk_rows)],
                o_hbm.at[pl.ds(start, chunk_rows)],
                sems.at[c],
            ).start()
        for c in range(n_chunks):
            start = base + c * chunk_rows
            pltpu.make_async_copy(
                x_hbm.at[pl.ds(start, chunk_rows)],
                o_hbm.at[pl.ds(start, chunk_rows)],
                sems.at[c],
            ).wait()

    x2d = x.reshape(rows, cols)   # layout plumbing only; data stays contiguous

    out2d = pl.pallas_call(
        _copy_kernel,
        out_shape=jax.ShapeDtypeStruct((rows, cols), x2d.dtype),
        grid=(num_programs,),
        in_specs=[pl.BlockSpec(memory_space=pl.ANY)],
        out_specs=pl.BlockSpec(memory_space=pl.ANY),
        scratch_shapes=[pltpu.SemaphoreType.DMA((n_chunks,))],
        compiler_params=pltpu.CompilerParams(
            dimension_semantics=("parallel",),
        ),
        cost_estimate=pl.CostEstimate(
            flops=0, transcendentals=0, bytes_accessed=2 * n * itemsize),
    )(x2d)

    return out2d.reshape(x.shape)


if __name__ == "__main__":
    key = jax.random.PRNGKey(0)
    # Shape consistent with a typical conv-feature input (NCHW).
    x = jax.random.normal(key, (2, 4, 16, 16), dtype=jnp.float32)

    y = dummy_layer_forward(x)
    y = jax.block_until_ready(y)

    assert y.shape == x.shape
    assert y.dtype == x.dtype
    assert bool(jnp.array_equal(y, x))

    # Donation-style fast path: identity with no copy (true DummyLayer semantics).
    z = dummy_layer_forward(x, materialize_copy=False)
    assert z is x

    print("KERNEL_OK")
</pallas_src>

<mosaic_0001>
module attributes {stable_mosaic.version = 11 : i64} {
  func.func @_copy_kernel(%arg0: i32, %arg1: memref<8x256xf32, #tpu.memory_space<any>>, %arg2: memref<8x256xf32, #tpu.memory_space<any>>, %arg3: memref<4x!tpu.dma_semaphore, #tpu.memory_space<semaphore_mem>>) attributes {dimension_semantics = [#tpu.dimension_semantics<parallel>], iteration_bounds = array<i64: 2>, scalar_prefetch = 0 : i64, scratch_operands = 1 : i64, tpu.core_type = #tpu.core_type<tc>, window_params = [{}, {}]} {
    %c4_i32 = arith.constant 4 : i32
    %0 = arith.muli %arg0, %c4_i32 : i32
    %c0_i32 = arith.constant 0 : i32
    %1 = arith.addi %0, %c0_i32 : i32
    %c0_i32_0 = arith.constant 0 : i32
    %c0_i32_1 = arith.constant 0 : i32
    %2 = tpu.memref_slice %arg1[%1, %c0_i32_1] : memref<8x256xf32, #tpu.memory_space<any>> -> memref<1x256xf32, #tpu.memory_space<any>>
    %c0_i32_2 = arith.constant 0 : i32
    %3 = tpu.memref_slice %arg2[%1, %c0_i32_2] : memref<8x256xf32, #tpu.memory_space<any>> -> memref<1x256xf32, #tpu.memory_space<any>>
    %4 = tpu.memref_slice %arg3[%c0_i32_0] : memref<4x!tpu.dma_semaphore, #tpu.memory_space<semaphore_mem>> -> memref<1x!tpu.dma_semaphore, #tpu.memory_space<semaphore_mem>>
    %5 = tpu.memref_squeeze %4 : memref<1x!tpu.dma_semaphore, #tpu.memory_space<semaphore_mem>> -> memref<!tpu.dma_semaphore, #tpu.memory_space<semaphore_mem>>
    tpu.enqueue_dma source(%2 : memref<1x256xf32, #tpu.memory_space<any>>) target(%3 : memref<1x256xf32, #tpu.memory_space<any>>) target_semaphore(%5 : memref<!tpu.dma_semaphore, #tpu.memory_space<semaphore_mem>>)
    %c1_i32 = arith.constant 1 : i32
    %6 = arith.addi %0, %c1_i32 : i32
    %c1_i32_3 = arith.constant 1 : i32
    %c0_i32_4 = arith.constant 0 : i32
    %7 = tpu.memref_slice %arg1[%6, %c0_i32_4] : memref<8x256xf32, #tpu.memory_space<any>> -> memref<1x256xf32, #tpu.memory_space<any>>
    %c0_i32_5 = arith.constant 0 : i32
    %8 = tpu.memref_slice %arg2[%6, %c0_i32_5] : memref<8x256xf32, #tpu.memory_space<any>> -> memref<1x256xf32, #tpu.memory_space<any>>
    %9 = tpu.memref_slice %arg3[%c1_i32_3] : memref<4x!tpu.dma_semaphore, #tpu.memory_space<semaphore_mem>> -> memref<1x!tpu.dma_semaphore, #tpu.memory_space<semaphore_mem>>
    %10 = tpu.memref_squeeze %9 : memref<1x!tpu.dma_semaphore, #tpu.memory_space<semaphore_mem>> -> memref<!tpu.dma_semaphore, #tpu.memory_space<semaphore_mem>>
    tpu.enqueue_dma source(%7 : memref<1x256xf32, #tpu.memory_space<any>>) target(%8 : memref<1x256xf32, #tpu.memory_space<any>>) target_semaphore(%10 : memref<!tpu.dma_semaphore, #tpu.memory_space<semaphore_mem>>)
    %c2_i32 = arith.constant 2 : i32
    %11 = arith.addi %0, %c2_i32 : i32
    %c2_i32_6 = arith.constant 2 : i32
    %c0_i32_7 = arith.constant 0 : i32
    %12 = tpu.memref_slice %arg1[%11, %c0_i32_7] : memref<8x256xf32, #tpu.memory_space<any>> -> memref<1x256xf32, #tpu.memory_space<any>>
    %c0_i32_8 = arith.constant 0 : i32
    %13 = tpu.memref_slice %arg2[%11, %c0_i32_8] : memref<8x256xf32, #tpu.memory_space<any>> -> memref<1x256xf32, #tpu.memory_space<any>>
    %14 = tpu.memref_slice %arg3[%c2_i32_6] : memref<4x!tpu.dma_semaphore, #tpu.memory_space<semaphore_mem>> -> memref<1x!tpu.dma_semaphore, #tpu.memory_space<semaphore_mem>>
    %15 = tpu.memref_squeeze %14 : memref<1x!tpu.dma_semaphore, #tpu.memory_space<semaphore_mem>> -> memref<!tpu.dma_semaphore, #tpu.memory_space<semaphore_mem>>
    tpu.enqueue_dma source(%12 : memref<1x256xf32, #tpu.memory_space<any>>) target(%13 : memref<1x256xf32, #tpu.memory_space<any>>) target_semaphore(%15 : memref<!tpu.dma_semaphore, #tpu.memory_space<semaphore_mem>>)
    %c3_i32 = arith.constant 3 : i32
    %16 = arith.addi %0, %c3_i32 : i32
    %c3_i32_9 = arith.constant 3 : i32
    %c0_i32_10 = arith.constant 0 : i32
    %17 = tpu.memref_slice %arg1[%16, %c0_i32_10] : memref<8x256xf32, #tpu.memory_space<any>> -> memref<1x256xf32, #tpu.memory_space<any>>
    %c0_i32_11 = arith.constant 0 : i32
    %18 = tpu.memref_slice %arg2[%16, %c0_i32_11] : memref<8x256xf32, #tpu.memory_space<any>> -> memref<1x256xf32, #tpu.memory_space<any>>
    %19 = tpu.memref_slice %arg3[%c3_i32_9] : memref<4x!tpu.dma_semaphore, #tpu.memory_space<semaphore_mem>> -> memref<1x!tpu.dma_semaphore, #tpu.memory_space<semaphore_mem>>
    %20 = tpu.memref_squeeze %19 : memref<1x!tpu.dma_semaphore, #tpu.memory_space<semaphore_mem>> -> memref<!tpu.dma_semaphore, #tpu.memory_space<semaphore_mem>>
    tpu.enqueue_dma source(%17 : memref<1x256xf32, #tpu.memory_space<any>>) target(%18 : memref<1x256xf32, #tpu.memory_space<any>>) target_semaphore(%20 : memref<!tpu.dma_semaphore, #tpu.memory_space<semaphore_mem>>)
    %c0_i32_12 = arith.constant 0 : i32
    %21 = arith.addi %0, %c0_i32_12 : i32
    %c0_i32_13 = arith.constant 0 : i32
    %c0_i32_14 = arith.constant 0 : i32
    %22 = tpu.memref_slice %arg1[%21, %c0_i32_14] : memref<8x256xf32, #tpu.memory_space<any>> -> memref<1x256xf32, #tpu.memory_space<any>>
    %c0_i32_15 = arith.constant 0 : i32
    %23 = tpu.memref_slice %arg2[%21, %c0_i32_15] : memref<8x256xf32, #tpu.memory_space<any>> -> memref<1x256xf32, #tpu.memory_space<any>>
    %24 = tpu.memref_slice %arg3[%c0_i32_13] : memref<4x!tpu.dma_semaphore, #tpu.memory_space<semaphore_mem>> -> memref<1x!tpu.dma_semaphore, #tpu.memory_space<semaphore_mem>>
    %25 = tpu.memref_squeeze %24 : memref<1x!tpu.dma_semaphore, #tpu.memory_space<semaphore_mem>> -> memref<!tpu.dma_semaphore, #tpu.memory_space<semaphore_mem>>
    tpu.wait_dma2 semaphore(%25 : memref<!tpu.dma_semaphore, #tpu.memory_space<semaphore_mem>>) src(%22 : memref<1x256xf32, #tpu.memory_space<any>>) dst(%23 : memref<1x256xf32, #tpu.memory_space<any>>)
    %c1_i32_16 = arith.constant 1 : i32
    %26 = arith.addi %0, %c1_i32_16 : i32
    %c1_i32_17 = arith.constant 1 : i32
    %c0_i32_18 = arith.constant 0 : i32
    %27 = tpu.memref_slice %arg1[%26, %c0_i32_18] : memref<8x256xf32, #tpu.memory_space<any>> -> memref<1x256xf32, #tpu.memory_space<any>>
    %c0_i32_19 = arith.constant 0 : i32
    %28 = tpu.memref_slice %arg2[%26, %c0_i32_19] : memref<8x256xf32, #tpu.memory_space<any>> -> memref<1x256xf32, #tpu.memory_space<any>>
    %29 = tpu.memref_slice %arg3[%c1_i32_17] : memref<4x!tpu.dma_semaphore, #tpu.memory_space<semaphore_mem>> -> memref<1x!tpu.dma_semaphore, #tpu.memory_space<semaphore_mem>>
    %30 = tpu.memref_squeeze %29 : memref<1x!tpu.dma_semaphore, #tpu.memory_space<semaphore_mem>> -> memref<!tpu.dma_semaphore, #tpu.memory_space<semaphore_mem>>
    tpu.wait_dma2 semaphore(%30 : memref<!tpu.dma_semaphore, #tpu.memory_space<semaphore_mem>>) src(%27 : memref<1x256xf32, #tpu.memory_space<any>>) dst(%28 : memref<1x256xf32, #tpu.memory_space<any>>)
    %c2_i32_20 = arith.constant 2 : i32
    %31 = arith.addi %0, %c2_i32_20 : i32
    %c2_i32_21 = arith.constant 2 : i32
    %c0_i32_22 = arith.constant 0 : i32
    %32 = tpu.memref_slice %arg1[%31, %c0_i32_22] : memref<8x256xf32, #tpu.memory_space<any>> -> memref<1x256xf32, #tpu.memory_space<any>>
    %c0_i32_23 = arith.constant 0 : i32
    %33 = tpu.memref_slice %arg2[%31, %c0_i32_23] : memref<8x256xf32, #tpu.memory_space<any>> -> memref<1x256xf32, #tpu.memory_space<any>>
    %34 = tpu.memref_slice %arg3[%c2_i32_21] : memref<4x!tpu.dma_semaphore, #tpu.memory_space<semaphore_mem>> -> memref<1x!tpu.dma_semaphore, #tpu.memory_space<semaphore_mem>>
    %35 = tpu.memref_squeeze %34 : memref<1x!tpu.dma_semaphore, #tpu.memory_space<semaphore_mem>> -> memref<!tpu.dma_semaphore, #tpu.memory_space<semaphore_mem>>
    tpu.wait_dma2 semaphore(%35 : memref<!tpu.dma_semaphore, #tpu.memory_space<semaphore_mem>>) src(%32 : memref<1x256xf32, #tpu.memory_space<any>>) dst(%33 : memref<1x256xf32, #tpu.memory_space<any>>)
    %c3_i32_24 = arith.constant 3 : i32
    %36 = arith.addi %0, %c3_i32_24 : i32
    %c3_i32_25 = arith.constant 3 : i32
    %c0_i32_26 = arith.constant 0 : i32
    %37 = tpu.memref_slice %arg1[%36, %c0_i32_26] : memref<8x256xf32, #tpu.memory_space<any>> -> memref<1x256xf32, #tpu.memory_space<any>>
    %c0_i32_27 = arith.constant 0 : i32
    %38 = tpu.memref_slice %arg2[%36, %c0_i32_27] : memref<8x256xf32, #tpu.memory_space<any>> -> memref<1x256xf32, #tpu.memory_space<any>>
    %39 = tpu.memref_slice %arg3[%c3_i32_25] : memref<4x!tpu.dma_semaphore, #tpu.memory_space<semaphore_mem>> -> memref<1x!tpu.dma_semaphore, #tpu.memory_space<semaphore_mem>>
    %40 = tpu.memref_squeeze %39 : memref<1x!tpu.dma_semaphore, #tpu.memory_space<semaphore_mem>> -> memref<!tpu.dma_semaphore, #tpu.memory_space<semaphore_mem>>
    tpu.wait_dma2 semaphore(%40 : memref<!tpu.dma_semaphore, #tpu.memory_space<semaphore_mem>>) src(%37 : memref<1x256xf32, #tpu.memory_space<any>>) dst(%38 : memref<1x256xf32, #tpu.memory_space<any>>)
    return
  }
}

</mosaic_0001>

<llo_original>
// kernel: tpu_custom_call.1
$region0: #{tpu_custom_call.1}
  #allocation0 [shape = 'u32[]', space=smem, size = 0x4, offset = 0x4, fixed_abs, tag = 'smem constant byte address 0x4 - core index']
  #allocation1 [shape = 'u32[144,128]{1,0:T(1,128)}', space=vmem, size = 0x12000, scoped, tag = 'internal scratch']
  #allocation2 [shape = 's32[4]{0}', space=sflag, size = 0x10, scoped, tag = 'scratch operand']
  #allocation3 [shape = 's32[]', space=sflag, size = 0x4, offset = 0, fixed_abs, tag = 'sflag constant byte address 0x0 - dummy sync flag']
  #allocation5 [shape = 's32[]', space=sflag, size = 0x4, offset = 0, fixed_abs, tag = 'sflag constant byte address 0x0 - dummy sync flag']
  #allocation7 [shape = 's32[]', space=sflag, size = 0x4, offset = 0, fixed_abs, tag = 'sflag constant byte address 0x0 - dummy sync flag']
  #allocation9 [shape = 's32[]', space=sflag, size = 0x4, offset = 0, fixed_abs, tag = 'sflag constant byte address 0x0 - dummy sync flag']
  %s0 = inlined_call_operand.hbm [shape: f32[8,256], index: 0, kind: input, shape index: {}]
  %s1 = inlined_call_operand.hbm [shape: f32[8,256], index: 1, kind: output, shape index: {}]
  %s2 = sld [smem:[#allocation0]]
  $region9: #{tpu_custom_call.1} parent=0
    _
  %s4 = ssub.s32 1, %s2
  %s5 = scalar_select 0, %s4, %s2
  loop: start=0, step=1, limit=2
  $region2: #{tpu_custom_call.1} parent=0 // loop_pre_header
    _
  $region3: #{tpu_custom_call.1} parent=0 // loop_header
    %s7 = sphi 0, %s11
    %p8 = scmp.ge.s32.totalorder %s7, 2
  $region4: #{tpu_custom_call.1} parent=0 // loop_header_branch
    %10 = sbr.rel (%p8) target = $region8
  $region5: #{tpu_custom_call.1} parent=0 // loop_body
    #allocation4 [shape = 'u32[3]{0}', space=smem, size = 0xc, scoped, tag = 'DMA stride descriptor']
    #allocation6 [shape = 'u32[3]{0}', space=smem, size = 0xc, scoped, tag = 'DMA stride descriptor']
    #allocation8 [shape = 'u32[3]{0}', space=smem, size = 0xc, scoped, tag = 'DMA stride descriptor']
    #allocation10 [shape = 'u32[3]{0}', space=smem, size = 0xc, scoped, tag = 'DMA stride descriptor']
    %s12 = sadd.s32 %s7, 1
    %s13 = smul.u32 %s7, 4
    %s14 = sshrl.u32 %s13, 3
    %s15 = sand.u32 %s13, 7
    %s16 = smul.u32 %s14, 16
    %s17 = sadd.s32 %s15, %s16
    %s18 = smul.addr %s17, 16
    %s19 = scalar_lea.hbm %s0, %s18
    %s20 = smul.addr %s17, 16
    %s21 = scalar_lea.hbm %s1, %s20
    %s23 = sshll.u32 1, 14
    %s24 = sxor.u32 4294967295, %s23
    %s27 = sshll.u32 3, 24
    %s28 = sxor.u32 4294967295, %s27
    %s29 = sand.u32 0, %s28
    %s31 = sor.u32 %s29, 0
    %34 = sst [smem:[#allocation4]] 128
    %s35 = scalar_lea.smem [#allocation4], 1
    %36 = sst [smem:[%s35]] 128
    %s37 = scalar_lea.smem [#allocation4], 2
    %38 = sst [smem:[%s37]] 1
    %40 = dma.general %s19, 32, %s21, [#allocation2], [#allocation3], [#allocation4], %s31, 0
    %s41 = sadd.s32 %s13, 1
    %s42 = sshrl.u32 %s41, 3
    %s43 = sand.u32 %s41, 7
    %s44 = smul.u32 %s42, 16
    %s45 = sadd.s32 %s43, %s44
    %s46 = smul.addr %s45, 16
    %s47 = scalar_lea.hbm %s0, %s46
    %s48 = smul.addr %s45, 16
    %s49 = scalar_lea.hbm %s1, %s48
    %s50 = scalar_lea.sflag [#allocation2], 1
    %s52 = sshll.u32 1, 14
    %s53 = sxor.u32 4294967295, %s52
    %s56 = sshll.u32 3, 24
    %s57 = sxor.u32 4294967295, %s56
    %s58 = sand.u32 0, %s57
    %s60 = sor.u32 %s58, 0
    %63 = sst [smem:[#allocation6]] 128
    %s64 = scalar_lea.smem [#allocation6], 1
    %65 = sst [smem:[%s64]] 128
    %s66 = scalar_lea.smem [#allocation6], 2
    %67 = sst [smem:[%s66]] 1
    %69 = dma.general %s47, 32, %s49, %s50, [#allocation5], [#allocation6], %s60, 0
    %s70 = sadd.s32 %s13, 2
    %s71 = sshrl.u32 %s70, 3
    %s72 = sand.u32 %s70, 7
    %s73 = smul.u32 %s71, 16
    %s74 = sadd.s32 %s72, %s73
    %s75 = smul.addr %s74, 16
    %s76 = scalar_lea.hbm %s0, %s75
    %s77 = smul.addr %s74, 16
    %s78 = scalar_lea.hbm %s1, %s77
    %s79 = scalar_lea.sflag [#allocation2], 2
    %s81 = sshll.u32 1, 14
    %s82 = sxor.u32 4294967295, %s81
    %s85 = sshll.u32 3, 24
    %s86 = sxor.u32 4294967295, %s85
    %s87 = sand.u32 0, %s86
    %s89 = sor.u32 %s87, 0
    %92 = sst [smem:[#allocation8]] 128
    %s93 = scalar_lea.smem [#allocation8], 1
    %94 = sst [smem:[%s93]] 128
    %s95 = scalar_lea.smem [#allocation8], 2
    %96 = sst [smem:[%s95]] 1
    %98 = dma.general %s76, 32, %s78, %s79, [#allocation7], [#allocation8], %s89, 0
    %s99 = sadd.s32 %s13, 3
    %s100 = sshrl.u32 %s99, 3
    %s101 = sand.u32 %s99, 7
    %s102 = smul.u32 %s100, 16
    %s103 = sadd.s32 %s101, %s102
    %s104 = smul.addr %s103, 16
    %s105 = scalar_lea.hbm %s0, %s104
    %s106 = smul.addr %s103, 16
    %s107 = scalar_lea.hbm %s1, %s106
    %s108 = scalar_lea.sflag [#allocation2], 3
    %s110 = sshll.u32 1, 14
    %s111 = sxor.u32 4294967295, %s110
    %s114 = sshll.u32 3, 24
    %s115 = sxor.u32 4294967295, %s114
    %s116 = sand.u32 0, %s115
    %s118 = sor.u32 %s116, 0
    %121 = sst [smem:[#allocation10]] 128
    %s122 = scalar_lea.smem [#allocation10], 1
    %123 = sst [smem:[%s122]] 128
    %s124 = scalar_lea.smem [#allocation10], 2
    %125 = sst [smem:[%s124]] 1
    %127 = dma.general %s105, 32, %s107, %s108, [#allocation9], [#allocation10], %s118, 0
    %s128 = smul.u32 1, 2
    %s129 = sshll.u32 %s128, 4
    %130 = dma.done [#allocation2], %s129
    %s131 = sshll.u32 %s128, 4
    %132 = dma.done %s50, %s131
    %s133 = sshll.u32 %s128, 4
    %134 = dma.done %s79, %s133
    %s135 = sshll.u32 %s128, 4
    %136 = dma.done %s108, %s135
  $region6: #{tpu_custom_call.1} parent=0 // loop_footer
    %s11 = sadd.s32 1, %s7
  $region7: #{tpu_custom_call.1} parent=0 // loop_footer_branch
    %6 = sbr.rel target = $region3
  $region8: #{tpu_custom_call.1} parent=0 // loop_exit
    _
  %137 = vsyncmov [#allocation2]
  %s138 = vpop.sfrf %137
  %p139 = scmp.eq.s32.totalorder %s138, 0
  %p140 = pneg %p139
  %142 = shalt.err (%p140)
  %s143 = scalar_lea.sflag [#allocation2], 1
  %144 = vsyncmov %s143
  %s145 = vpop.sfrf %144
  %p146 = scmp.eq.s32.totalorder %s145, 0
  %p147 = pneg %p146
  %149 = shalt.err (%p147)
  %s150 = scalar_lea.sflag [#allocation2], 2
  %151 = vsyncmov %s150
  %s152 = vpop.sfrf %151
  %p153 = scmp.eq.s32.totalorder %s152, 0
  %p154 = pneg %p153
  %156 = shalt.err (%p154)
  %s157 = scalar_lea.sflag [#allocation2], 3
  %158 = vsyncmov %s157
  %s159 = vpop.sfrf %158
  %p160 = scmp.eq.s32.totalorder %s159, 0
  %p161 = pneg %p160
  %163 = shalt.err (%p161)

</llo_original>
